<compile_context>
chip_gen: v7x
topology: tpu7x:2x2x1
jax: 0.10.0
libtpu: 0.0.40
codegen_flags: <defaults>
</compile_context>

<pallas_src>
import jax
import jax.numpy as jnp
from jax.experimental import pallas as pl
from jax.experimental.pallas import tpu as pltpu


def _round_up(n, m):
    return ((n + m - 1) // m) * m


def deepms_kernel(x_ref, w1_ref, b1_ref, w2_ref, b2_ref, o_ref):
    # Cast the f32 activation tile to the matmul dtype *inside* the kernel: the
    # VPU cast hides under the DMA/MXU and avoids an extra XLA pass over x.
    x = x_ref[...].astype(w1_ref.dtype)

    # Encoder: h = relu(x @ W1 + b1)   (bf16 operands, f32 MXU accumulation)
    h = jnp.dot(x, w1_ref[...], preferred_element_type=jnp.float32)
    h = jnp.maximum(h + b1_ref[...], 0.0)          # b1 is (1, Hp), broadcasts

    # Decoder: y = softmax(h @ W2 + b2, axis=-1)
    # Softmax math stays f32 (v5e VPU/EUP have no bf16).
    logits = jnp.dot(h.astype(w2_ref.dtype), w2_ref[...],
                     preferred_element_type=jnp.float32)
    logits = logits + b2_ref[...]                  # b2 is (1, D)
    m = jnp.max(logits, axis=-1, keepdims=True)
    e = jnp.exp(logits - m)
    denom = jnp.sum(e, axis=-1, keepdims=True)
    # approx reciprocal lowers to the EUP slot (off the VPU critical path).
    # Rows sum to 1 only to ~1e-3 relative; use approx=False if exact
    # normalization is required downstream.
    o_ref[...] = (e * pl.reciprocal(denom, approx=True)).astype(o_ref.dtype)


def prepare_deepms_params(w1, b1, w2, b2, *, compute_dtype=jnp.bfloat16):
    """One-time parameter prep (do NOT call per forward step).

    * pads the hidden dim up to a full 128-lane tile (numerically exact:
      relu(x @ 0 + 0) = 0 and the matching zero rows of W2 contribute nothing),
    * casts matmul operands to `compute_dtype`, keeps biases in f32.
    Weights are stored [in, out] (PyTorch nn.Linear stores [out, in]).
    """
    D, H = w1.shape
    Hp = _round_up(max(H, 128), 128)
    b1 = b1.reshape(1, -1)
    b2 = b2.reshape(1, -1)
    if Hp != H:
        w1 = jnp.pad(w1, ((0, 0), (0, Hp - H)))
        b1 = jnp.pad(b1, ((0, 0), (0, Hp - H)))
        w2 = jnp.pad(w2, ((0, Hp - H), (0, 0)))
    return (w1.astype(compute_dtype), b1.astype(jnp.float32),
            w2.astype(compute_dtype), b2.astype(jnp.float32))


def deepms_forward(x, w1, b1, w2, b2, *, tb=1024, out_dtype=jnp.float32):
    """DeepMS forward: softmax(relu(x @ W1 + b1) @ W2 + b2, axis=-1).

    x: [B, D] float32 (cast to bf16 inside the kernel).
    w1/b1/w2/b2: outputs of prepare_deepms_params
    (w1: [D, Hp] bf16, b1: [1, Hp] f32, w2: [Hp, D] bf16, b2: [1, D] f32).
    Returns softmax probabilities [B, D] in `out_dtype`.
    """
    B, D = x.shape
    Hp = w1.shape[1]

    # --- Batch tile: multiple of 16 (covers bf16 output sublane packing).
    # No host-side padding: grid = cdiv(B, tb_eff); Pallas masks the ragged
    # tail block (OOB rows are never written; softmax is row-wise, so garbage
    # rows cannot leak into valid ones).
    sub = 16
    tb_eff = max(_round_up(min(tb, B), sub), sub)
    # v7x has two TensorCores: make sure the ("parallel",) grid has >= 2 steps
    # when the batch is big enough to split (weights are tiny, so duplicating
    # them per core is free). Harmless on single-TC v5e / v6e.
    min_steps = 2
    if B >= 2 * sub * min_steps:
        tb_eff = min(tb_eff, _round_up(pl.cdiv(B, min_steps), sub))
    grid = (pl.cdiv(B, tb_eff),)

    # --- VMEM budget: double-buffered x/out tiles + resident weights + f32
    # temporaries, 2x headroom, capped at ~75% of this generation's VMEM.
    cdt = jnp.dtype(w1.dtype).itemsize
    odt = jnp.dtype(out_dtype).itemsize
    vmem_budget = (
        2 * tb_eff * D * 4               # x tiles (f32, double-buffered)
        + 2 * tb_eff * D * odt           # out tiles (double-buffered)
        + (D * Hp + Hp * D) * cdt        # resident W1 / W2 (constant index)
        + (Hp + D) * 4                   # biases
        + 4 * tb_eff * max(D, Hp) * 4    # f32 temporaries (h, logits, e, ...)
    )
    try:
        vmem_cap = int(pltpu.get_tpu_info().vmem_capacity_bytes)
    except Exception:
        vmem_cap = 64 << 20              # conservative (v7x) fallback
    vmem_limit = int(min(max(2 * vmem_budget, 32 << 20), (vmem_cap * 3) // 4))

    return pl.pallas_call(
        deepms_kernel,
        out_shape=jax.ShapeDtypeStruct((B, D), out_dtype),
        grid_spec=pltpu.PrefetchScalarGridSpec(
            num_scalar_prefetch=0,
            grid=grid,
            in_specs=[
                pl.BlockSpec((tb_eff, D), lambda i: (i, 0)),   # x tile
                pl.BlockSpec((D, Hp), lambda i: (0, 0)),       # W1 (resident)
                pl.BlockSpec((1, Hp), lambda i: (0, 0)),       # b1
                pl.BlockSpec((Hp, D), lambda i: (0, 0)),       # W2 (resident)
                pl.BlockSpec((1, D), lambda i: (0, 0)),        # b2
            ],
            out_specs=pl.BlockSpec((tb_eff, D), lambda i: (i, 0)),
        ),
        compiler_params=pltpu.CompilerParams(
            dimension_semantics=("parallel",),
            vmem_limit_bytes=vmem_limit,
        ),
    )(x, w1, b1, w2, b2)


def init_deepms_params(key, original_dim, encoding_dim):
    """Deterministic init mimicking PyTorch nn.Linear default (uniform +/- 1/sqrt(fan_in))."""
    k1, k2, k3, k4 = jax.random.split(key, 4)
    bound1 = 1.0 / jnp.sqrt(original_dim)
    bound2 = 1.0 / jnp.sqrt(encoding_dim)
    # Stored already transposed: [in, out]
    w1 = jax.random.uniform(k1, (original_dim, encoding_dim), jnp.float32,
                            minval=-bound1, maxval=bound1)
    b1 = jax.random.uniform(k2, (1, encoding_dim), jnp.float32,
                            minval=-bound1, maxval=bound1)
    w2 = jax.random.uniform(k3, (encoding_dim, original_dim), jnp.float32,
                            minval=-bound2, maxval=bound2)
    b2 = jax.random.uniform(k4, (1, original_dim), jnp.float32,
                            minval=-bound2, maxval=bound2)
    return w1, b1, w2, b2


def deepms_reference(x, w1, b1, w2, b2):
    h = jnp.maximum(x @ w1 + b1, 0.0)
    logits = h @ w2 + b2
    return jax.nn.softmax(logits, axis=-1)


if __name__ == "__main__":
    # Small shapes consistent with the module: original_dim=128, encoding_dim=32.
    D, H = 128, 32
    key = jax.random.PRNGKey(0)
    kx, kp = jax.random.split(key)
    w1, b1, w2, b2 = init_deepms_params(kp, D, H)
    params = prepare_deepms_params(w1, b1, w2, b2)   # one-time pad + bf16 cast

    # Case 1: small batch (single ragged tile, grid=(1,)).
    B1 = 8
    x1 = jax.random.normal(kx, (B1, D), jnp.float32)
    out1 = jax.block_until_ready(deepms_forward(x1, *params))
    ref1 = deepms_reference(x1, w1, b1, w2, b2)
    assert out1.shape == (B1, D) and out1.dtype == jnp.float32
    assert jnp.allclose(out1, ref1, atol=5e-3, rtol=2e-2), "mismatch vs reference (B=8)"
    assert jnp.allclose(jnp.sum(out1, axis=-1), 1.0, atol=1e-2)

    # Case 2: ragged batch exercising a multi-step grid with a masked tail
    # block (no host-side pad / slice copies): B=300, tb=128 -> grid=(3,).
    B2 = 300
    x2 = jax.random.normal(jax.random.fold_in(kx, 1), (B2, D), jnp.float32)
    out2 = jax.block_until_ready(deepms_forward(x2, *params, tb=128))
    ref2 = deepms_reference(x2, w1, b1, w2, b2)
    assert out2.shape == (B2, D)
    assert jnp.allclose(out2, ref2, atol=5e-3, rtol=2e-2), "mismatch vs reference (B=300)"
    assert jnp.allclose(jnp.sum(out2, axis=-1), 1.0, atol=1e-2)

    # Case 3: bf16 output (halves output HBM traffic on this mem-bound kernel).
    out3 = jax.block_until_ready(
        deepms_forward(x2, *params, tb=128, out_dtype=jnp.bfloat16))
    assert out3.shape == (B2, D) and out3.dtype == jnp.bfloat16
    assert jnp.allclose(out3.astype(jnp.float32), ref2, atol=2e-2, rtol=5e-2)

    print("KERNEL_OK")
</pallas_src>

<mosaic_0001>
module attributes {stable_mosaic.version = 11 : i64} {
  func.func @deepms_kernel(%arg0: i32, %arg1: memref<16x128xf32, #tpu.memory_space<vmem>>, %arg2: memref<128x128xbf16, #tpu.memory_space<vmem>>, %arg3: memref<1x128xf32, #tpu.memory_space<vmem>>, %arg4: memref<128x128xbf16, #tpu.memory_space<vmem>>, %arg5: memref<1x128xf32, #tpu.memory_space<vmem>>, %arg6: memref<16x128xf32, #tpu.memory_space<vmem>>) attributes {dimension_semantics = [#tpu.dimension_semantics<parallel>], iteration_bounds = array<i64: 1>, scalar_prefetch = 0 : i64, scratch_operands = 0 : i64, tpu.core_type = #tpu.core_type<tc>, window_params = [{transform_indices = @transform_0, window_bounds = array<i64: 16, 128>}, {pipeline_mode = #tpu.pipeline_mode<synchronous>, transform_indices = @transform_1, window_bounds = array<i64: 128, 128>}, {pipeline_mode = #tpu.pipeline_mode<synchronous>, transform_indices = @transform_2, window_bounds = array<i64: 1, 128>}, {pipeline_mode = #tpu.pipeline_mode<synchronous>, transform_indices = @transform_3, window_bounds = array<i64: 128, 128>}, {pipeline_mode = #tpu.pipeline_mode<synchronous>, transform_indices = @transform_4, window_bounds = array<i64: 1, 128>}, {transform_indices = @transform_5, window_bounds = array<i64: 16, 128>}]} {
    %c0 = arith.constant 0 : index
    %c0_0 = arith.constant 0 : index
    %0 = vector.load %arg1[%c0, %c0_0] : memref<16x128xf32, #tpu.memory_space<vmem>>, vector<16x128xf32>
    %1 = arith.truncf %0 : vector<16x128xf32> to vector<16x128xbf16>
    %c0_1 = arith.constant 0 : index
    %c0_2 = arith.constant 0 : index
    %2 = vector.load %arg2[%c0_1, %c0_2] : memref<128x128xbf16, #tpu.memory_space<vmem>>, vector<128x128xbf16>
    %cst = arith.constant dense<0.000000e+00> : vector<16x128xf32>
    %3 = tpu.matmul %1, %2, %cst {dimension_numbers = #tpu.dot_dimension_numbers<[1], [0], [0], [1], [0, 0, 1, 1], [], []>} : vector<16x128xbf16>, vector<128x128xbf16>, vector<16x128xf32> -> vector<16x128xf32>
    %c0_3 = arith.constant 0 : index
    %c0_4 = arith.constant 0 : index
    %4 = vector.load %arg3[%c0_3, %c0_4] : memref<1x128xf32, #tpu.memory_space<vmem>>, vector<1x128xf32>
    %5 = vector.broadcast %4 : vector<1x128xf32> to vector<16x128xf32>
    %6 = arith.addf %3, %5 : vector<16x128xf32>
    %cst_5 = arith.constant 0.000000e+00 : f32
    %7 = vector.broadcast %cst_5 : f32 to vector<16x128xf32>
    %8 = arith.maximumf %6, %7 : vector<16x128xf32>
    %9 = arith.truncf %8 : vector<16x128xf32> to vector<16x128xbf16>
    %c0_6 = arith.constant 0 : index
    %c0_7 = arith.constant 0 : index
    %10 = vector.load %arg4[%c0_6, %c0_7] : memref<128x128xbf16, #tpu.memory_space<vmem>>, vector<128x128xbf16>
    %cst_8 = arith.constant dense<0.000000e+00> : vector<16x128xf32>
    %11 = tpu.matmul %9, %10, %cst_8 {dimension_numbers = #tpu.dot_dimension_numbers<[1], [0], [0], [1], [0, 0, 1, 1], [], []>} : vector<16x128xbf16>, vector<128x128xbf16>, vector<16x128xf32> -> vector<16x128xf32>
    %c0_9 = arith.constant 0 : index
    %c0_10 = arith.constant 0 : index
    %12 = vector.load %arg5[%c0_9, %c0_10] : memref<1x128xf32, #tpu.memory_space<vmem>>, vector<1x128xf32>
    %13 = vector.broadcast %12 : vector<1x128xf32> to vector<16x128xf32>
    %14 = arith.addf %11, %13 : vector<16x128xf32>
    %cst_11 = arith.constant dense<0xFF800000> : vector<16xf32>
    %15 = vector.multi_reduction <maximumf>, %14, %cst_11 [1] : vector<16x128xf32> to vector<16xf32>
    %16 = vector.shape_cast %15 : vector<16xf32> to vector<16x1xf32>
    %17 = vector.broadcast %16 : vector<16x1xf32> to vector<16x128xf32>
    %18 = arith.subf %14, %17 : vector<16x128xf32>
    %19 = math.exp %18 : vector<16x128xf32>
    %cst_12 = arith.constant dense<0.000000e+00> : vector<16xf32>
    %20 = vector.multi_reduction <add>, %19, %cst_12 [1] : vector<16x128xf32> to vector<16xf32>
    %21 = vector.shape_cast %20 : vector<16xf32> to vector<16x1xf32>
    %22 = tpu.reciprocal %21 {approx = true} : vector<16x1xf32> -> vector<16x1xf32>
    %23 = vector.broadcast %22 : vector<16x1xf32> to vector<16x128xf32>
    %24 = arith.mulf %19, %23 : vector<16x128xf32>
    %c0_13 = arith.constant 0 : index
    %c0_14 = arith.constant 0 : index
    %25 = vector.load %arg6[%c0_13, %c0_14] : memref<16x128xf32, #tpu.memory_space<vmem>>, vector<16x128xf32>
    tpu.vector_store %arg6[%c0_13, %c0_14], %24 {strides = array<i32>} : memref<16x128xf32, #tpu.memory_space<vmem>>, vector<16x128xf32>,
    return
  }
  func.func @transform_0(%arg0: i32) -> (i32, i32) {
    %c0_i32 = arith.constant 0 : i32
    %c0_i32_0 = arith.constant 0 : i32
    return %arg0, %c0_i32 : i32, i32
  }
  func.func @transform_1(%arg0: i32) -> (i32, i32) {
    %c0_i32 = arith.constant 0 : i32
    %c0_i32_0 = arith.constant 0 : i32
    %c0_i32_1 = arith.constant 0 : i32
    return %c0_i32, %c0_i32_0 : i32, i32
  }
  func.func @transform_2(%arg0: i32) -> (i32, i32) {
    %c0_i32 = arith.constant 0 : i32
    %c0_i32_0 = arith.constant 0 : i32
    %c0_i32_1 = arith.constant 0 : i32
    return %c0_i32, %c0_i32_0 : i32, i32
  }
  func.func @transform_3(%arg0: i32) -> (i32, i32) {
    %c0_i32 = arith.constant 0 : i32
    %c0_i32_0 = arith.constant 0 : i32
    %c0_i32_1 = arith.constant 0 : i32
    return %c0_i32, %c0_i32_0 : i32, i32
  }
  func.func @transform_4(%arg0: i32) -> (i32, i32) {
    %c0_i32 = arith.constant 0 : i32
    %c0_i32_0 = arith.constant 0 : i32
    %c0_i32_1 = arith.constant 0 : i32
    return %c0_i32, %c0_i32_0 : i32, i32
  }
  func.func @transform_5(%arg0: i32) -> (i32, i32) {
    %c0_i32 = arith.constant 0 : i32
    %c0_i32_0 = arith.constant 0 : i32
    return %arg0, %c0_i32 : i32, i32
  }
}

</mosaic_0001>

<llo_original>
// kernel: tpu_custom_call.1
$region0: #{tpu_custom_call.1}
  #allocation0 [shape = 'u32[]', space=smem, size = 0x4, offset = 0x4, fixed_abs, tag = 'smem constant byte address 0x4 - core index']
  #allocation1 [shape = 'u32[144,128]{1,0:T(1,128)}', space=vmem, size = 0x12000, scoped, tag = 'internal scratch']
  %s0 = inlined_call_operand.hbm [shape: f32[8,128], index: 0, kind: input, shape index: {}]
  %s1 = inlined_call_operand.hbm [shape: bf16[128,128], index: 1, kind: input, shape index: {}]
  %s2 = inlined_call_operand.vmem [shape: f32[1,128], index: 2, kind: input, shape index: {}]
  %s3 = inlined_call_operand.hbm [shape: bf16[128,128], index: 3, kind: input, shape index: {}]
  %s4 = inlined_call_operand.vmem [shape: f32[1,128], index: 4, kind: input, shape index: {}]
  %s5 = inlined_call_operand.hbm [shape: f32[8,128], index: 5, kind: output, shape index: {}]
  %s6 = sld [smem:[#allocation0]]
  $region42: #{tpu_custom_call.1} parent=0
    _
  %s8 = ssub.s32 1, %s6
  %s9 = scalar_select 0, %s8, %s6
  $region1: #{tpu_custom_call.1} parent=0
    #allocation2 [shape = 'u8[8192]{0}', space=vmem, size = 0x2000, scoped, tag = 'input window, operand 0, single buffered']
    #allocation3 [shape = 's32[1]{0}', space=sflag, size = 0x4, scoped, tag = 'scoped memory for tpu_custom_call.1']
    #allocation4 [shape = 's32[1]{0}', space=sflag, size = 0x4, scoped, tag = 'scoped memory for tpu_custom_call.1']
    #allocation5 [shape = 'u8[32768]{0}', space=vmem, size = 0x8000, scoped, tag = 'input window, operand 1, single buffered']
    #allocation6 [shape = 's32[1]{0}', space=sflag, size = 0x4, scoped, tag = 'scoped memory for tpu_custom_call.1']
    #allocation7 [shape = 'u8[32768]{0}', space=vmem, size = 0x8000, scoped, tag = 'input window, operand 3, single buffered']
    #allocation8 [shape = 'u8[8192]{0}', space=vmem, size = 0x2000, scoped, tag = 'output window, operand 0, single buffered']
    %10 = vsyncpa [#allocation3], 0
    %11 = vsyncpa [#allocation6], 0
    %12 = vsyncpa [#allocation4], 0
    // Predicated region
    $region2: #{tpu_custom_call.1} parent=1 // pred_check
      _
    $region3: #{tpu_custom_call.1} parent=1 // pred_check_branch
      %14 = sbr.rel (0) target = $region5
    $region4: #{tpu_custom_call.1} parent=1 // pred_region
      %s16 = ssub.s32 256, 128
      %17 = vsyncadd [#allocation3], %s16
      %s18 = sshll.u32 [#allocation2], 4
      %s19 = int_to_ptr.vmem [resolvable:$true] %s18
      %24 = dma.hbm_to_vmem [thread:$0]  %s0, 128, %s19, [#allocation3], 128, 128, 8
    $region5: #{tpu_custom_call.1} parent=1 // pred_fallthru
      _
    // Predicated region
    $region6: #{tpu_custom_call.1} parent=1 // pred_check
      _
    $region7: #{tpu_custom_call.1} parent=1 // pred_check_branch
      %26 = sbr.rel (0) target = $region9
    $region8: #{tpu_custom_call.1} parent=1 // pred_region
      %s28 = ssub.s32 1024, 1024
      %29 = vsyncadd [#allocation6], %s28
      %s30 = sshll.u32 [#allocation5], 4
      %s31 = int_to_ptr.vmem [resolvable:$true] %s30
      %36 = dma.hbm_to_vmem [thread:$0]  %s1, 1024, %s31, [#allocation6], 64, 64, 4
    $region9: #{tpu_custom_call.1} parent=1 // pred_fallthru
      _
    // Predicated region
    $region10: #{tpu_custom_call.1} parent=1 // pred_check
      _
    $region11: #{tpu_custom_call.1} parent=1 // pred_check_branch
      %38 = sbr.rel (0) target = $region13
    $region12: #{tpu_custom_call.1} parent=1 // pred_region
      _
    $region13: #{tpu_custom_call.1} parent=1 // pred_fallthru
      _
    // Predicated region
    $region14: #{tpu_custom_call.1} parent=1 // pred_check
      _
    $region15: #{tpu_custom_call.1} parent=1 // pred_check_branch
      %40 = sbr.rel (0) target = $region17
    $region16: #{tpu_custom_call.1} parent=1 // pred_region
      %s42 = ssub.s32 1024, 1024
      %43 = vsyncadd [#allocation6], %s42
      %s44 = sshll.u32 [#allocation7], 4
      %s45 = int_to_ptr.vmem [resolvable:$true] %s44
      %50 = dma.hbm_to_vmem [thread:$0]  %s3, 1024, %s45, [#allocation6], 64, 64, 4
    $region17: #{tpu_custom_call.1} parent=1 // pred_fallthru
      _
    // Predicated region
    $region18: #{tpu_custom_call.1} parent=1 // pred_check
      _
    $region19: #{tpu_custom_call.1} parent=1 // pred_check_branch
      %52 = sbr.rel (0) target = $region21
    $region20: #{tpu_custom_call.1} parent=1 // pred_region
      _
    $region21: #{tpu_custom_call.1} parent=1 // pred_fallthru
      _
    // Predicated region
    $region22: #{tpu_custom_call.1} parent=1 // pred_check
      _
    $region23: #{tpu_custom_call.1} parent=1 // pred_check_branch
      %54 = sbr.rel (0) target = $region25
    $region24: #{tpu_custom_call.1} parent=1 // pred_region
      %55 = dma.done [#allocation3], 256
    $region25: #{tpu_custom_call.1} parent=1 // pred_fallthru
      _
    // Predicated region
    $region26: #{tpu_custom_call.1} parent=1 // pred_check
      _
    $region27: #{tpu_custom_call.1} parent=1 // pred_check_branch
      %57 = sbr.rel (0) target = $region29
    $region28: #{tpu_custom_call.1} parent=1 // pred_region
      %58 = dma.done [#allocation6], 1024
    $region29: #{tpu_custom_call.1} parent=1 // pred_fallthru
      _
    // Predicated region
    $region30: #{tpu_custom_call.1} parent=1 // pred_check
      _
    $region31: #{tpu_custom_call.1} parent=1 // pred_check_branch
      %60 = sbr.rel (0) target = $region33
    $region32: #{tpu_custom_call.1} parent=1 // pred_region
      %61 = dma.done [#allocation6], 1024
    $region33: #{tpu_custom_call.1} parent=1 // pred_fallthru
      _
    %v63 = vld [vmem:[#allocation2] sm:$0xff]
    %v64 = vld [vmem:[#allocation2 + $0x8] sm:$0xff]
    %v65 = vpack.c.bf16 %v64, %v63
    %v66 = vld [vmem:[#allocation5] sm:$0xf]
    %v67 = vld [vmem:[#allocation5 + $0x4] sm:$0xf]
    %v68 = vld [vmem:[#allocation5 + $0x8] sm:$0xf]
    %v69 = vld [vmem:[#allocation5 + $0xc] sm:$0xf]
    %v70 = vld [vmem:[#allocation5 + $0x10] sm:$0xf]
    %v71 = vld [vmem:[#allocation5 + $0x14] sm:$0xf]
    %v72 = vld [vmem:[#allocation5 + $0x18] sm:$0xf]
    %v73 = vld [vmem:[#allocation5 + $0x1c] sm:$0xf]
    %v74 = vld [vmem:[#allocation5 + $0x20] sm:$0xf]
    %v75 = vld [vmem:[#allocation5 + $0x24] sm:$0xf]
    %v76 = vld [vmem:[#allocation5 + $0x28] sm:$0xf]
    %v77 = vld [vmem:[#allocation5 + $0x2c] sm:$0xf]
    %v78 = vld [vmem:[#allocation5 + $0x30] sm:$0xf]
    %v79 = vld [vmem:[#allocation5 + $0x34] sm:$0xf]
    %v80 = vld [vmem:[#allocation5 + $0x38] sm:$0xf]
    %v81 = vld [vmem:[#allocation5 + $0x3c] sm:$0xf]
    %v82 = vld [vmem:[%s2] sm:$0x1]
    %v84 = vlaneseq
    %v85 = vshrl.u32 %v84, 7
    %v86 = vsub.s32 0, %v85
    %v87 = vrot.slane %v82, %v86
    %v105 = vunpack.c.l.b16 %v66
    %v106 = vunpack.c.l.b16 %v67
    %v107 = vunpack.c.l.b16 %v68
    %v108 = vunpack.c.l.b16 %v69
    %v109 = vunpack.c.l.b16 %v70
    %v110 = vunpack.c.l.b16 %v71
    %v111 = vunpack.c.l.b16 %v72
    %v112 = vunpack.c.l.b16 %v73
    %v113 = vunpack.c.l.b16 %v74
    %v114 = vunpack.c.l.b16 %v75
    %v115 = vunpack.c.l.b16 %v76
    %v116 = vunpack.c.l.b16 %v77
    %v117 = vunpack.c.l.b16 %v78
    %v118 = vunpack.c.l.b16 %v79
    %v119 = vunpack.c.l.b16 %v80
    %v120 = vunpack.c.l.b16 %v81
    %v121 = vpack.c.b16 %v106, %v105
    %v122 = vpack.c.b16 %v108, %v107
    %v123 = vpack.c.b16 %v110, %v109
    %v124 = vpack.c.b16 %v112, %v111
    %v125 = vpack.c.b16 %v114, %v113
    %v126 = vpack.c.b16 %v116, %v115
    %v127 = vpack.c.b16 %v118, %v117
    %v128 = vpack.c.b16 %v120, %v119
    %137 = vmatprep.subr.bf16.mxu0 0
    %138 = vmatpush1.bf16.msra.mxu0 %v121
    %139 = vmatprep.subr.bf16.mxu0 0
    %140 = vmatpush1.bf16.msra.mxu0 %v122
    %141 = vmatprep.subr.bf16.mxu0 0
    %142 = vmatpush1.bf16.msra.mxu0 %v123
    %143 = vmatprep.subr.bf16.mxu0 0
    %144 = vmatpush1.bf16.msra.mxu0 %v124
    %145 = vmatprep.subr.bf16.mxu0 0
    %146 = vmatpush1.bf16.msra.mxu0 %v125
    %147 = vmatprep.subr.bf16.mxu0 0
    %148 = vmatpush1.bf16.msra.mxu0 %v126
    %149 = vmatprep.subr.bf16.mxu0 0
    %150 = vmatpush1.bf16.msra.mxu0 %v127
    %151 = vmatprep.subr.bf16.mxu0 0
    %152 = vmatpush1.bf16.msra.mxu0 %v128
    %153 = vmatprep.subr.bf16.mxu0 0
    %154 = vmatpush1.bf16.msra.mxu0 0
    %155 = vmatprep.subr.bf16.mxu0 0
    %156 = vmatpush1.bf16.msra.mxu0 0
    %157 = vmatprep.subr.bf16.mxu0 0
    %158 = vmatpush1.bf16.msra.mxu0 0
    %159 = vmatprep.subr.bf16.mxu0 0
    %160 = vmatpush1.bf16.msra.mxu0 0
    %161 = vmatprep.subr.bf16.mxu0 0
    %162 = vmatpush1.bf16.msra.mxu0 0
    %163 = vmatprep.subr.bf16.mxu0 0
    %164 = vmatpush1.bf16.msra.mxu0 0
    %165 = vmatprep.subr.bf16.mxu0 0
    %166 = vmatpush1.bf16.msra.mxu0 0
    %167 = vmatprep.subr.bf16.mxu0 0
    %168 = vmatpush1.bf16.msra.mxu0 0
    %169 = vmatprep.mubr.bf16.mxu0 0
    %170 = vmatmul.mubr.bf16.gmra.mrb[0].mxu0 %v65
    %v171 = vpop.f32.mrb[0].mxu0
    %v172 = vadd.f32 %v87, %v171
    %v173 = vpop.f32.mrb[0].mxu0
    %v174 = vpop.f32.mrb[0].mxu0
    %v175 = vadd.f32 %v87, %v174
    %v176 = vpop.f32.mrb[0].mxu0
    %177 = vdwg.mxu0
    %v178 = vmax.f32 %v172, 0.0
    %v179 = vmax.f32 %v175, 0.0
    %v180 = vpack.c.bf16 %v179, %v178
    %v181 = vld [vmem:[#allocation7] sm:$0xf]
    %v182 = vld [vmem:[#allocation7 + $0x4] sm:$0xf]
    %v183 = vld [vmem:[#allocation7 + $0x8] sm:$0xf]
    %v184 = vld [vmem:[#allocation7 + $0xc] sm:$0xf]
    %v185 = vld [vmem:[#allocation7 + $0x10] sm:$0xf]
    %v186 = vld [vmem:[#allocation7 + $0x14] sm:$0xf]
    %v187 = vld [vmem:[#allocation7 + $0x18] sm:$0xf]
    %v188 = vld [vmem:[#allocation7 + $0x1c] sm:$0xf]
    %v189 = vld [vmem:[#allocation7 + $0x20] sm:$0xf]
    %v190 = vld [vmem:[#allocation7 + $0x24] sm:$0xf]
    %v191 = vld [vmem:[#allocation7 + $0x28] sm:$0xf]
    %v192 = vld [vmem:[#allocation7 + $0x2c] sm:$0xf]
    %v193 = vld [vmem:[#allocation7 + $0x30] sm:$0xf]
    %v194 = vld [vmem:[#allocation7 + $0x34] sm:$0xf]
    %v195 = vld [vmem:[#allocation7 + $0x38] sm:$0xf]
    %v196 = vld [vmem:[#allocation7 + $0x3c] sm:$0xf]
    %v197 = vld [vmem:[%s4] sm:$0x1]
    %v199 = vlaneseq
    %v200 = vshrl.u32 %v199, 7
    %v201 = vsub.s32 0, %v200
    %v202 = vrot.slane %v197, %v201
    %v220 = vunpack.c.l.b16 %v181
    %v221 = vunpack.c.l.b16 %v182
    %v222 = vunpack.c.l.b16 %v183
    %v223 = vunpack.c.l.b16 %v184
    %v224 = vunpack.c.l.b16 %v185
    %v225 = vunpack.c.l.b16 %v186
    %v226 = vunpack.c.l.b16 %v187
    %v227 = vunpack.c.l.b16 %v188
    %v228 = vunpack.c.l.b16 %v189
    %v229 = vunpack.c.l.b16 %v190
    %v230 = vunpack.c.l.b16 %v191
    %v231 = vunpack.c.l.b16 %v192
    %v232 = vunpack.c.l.b16 %v193
    %v233 = vunpack.c.l.b16 %v194
    %v234 = vunpack.c.l.b16 %v195
    %v235 = vunpack.c.l.b16 %v196
    %v236 = vpack.c.b16 %v221, %v220
    %v237 = vpack.c.b16 %v223, %v222
    %v238 = vpack.c.b16 %v225, %v224
    %v239 = vpack.c.b16 %v227, %v226
    %v240 = vpack.c.b16 %v229, %v228
    %v241 = vpack.c.b16 %v231, %v230
    %v242 = vpack.c.b16 %v233, %v232
    %v243 = vpack.c.b16 %v235, %v234
    %252 = vmatprep.subr.bf16.mxu0 0
    %253 = vmatpush1.bf16.msra.mxu0 %v236
    %254 = vmatprep.subr.bf16.mxu0 0
    %255 = vmatpush1.bf16.msra.mxu0 %v237
    %256 = vmatprep.subr.bf16.mxu0 0
    %257 = vmatpush1.bf16.msra.mxu0 %v238
    %258 = vmatprep.subr.bf16.mxu0 0
    %259 = vmatpush1.bf16.msra.mxu0 %v239
    %260 = vmatprep.subr.bf16.mxu0 0
    %261 = vmatpush1.bf16.msra.mxu0 %v240
    %262 = vmatprep.subr.bf16.mxu0 0
    %263 = vmatpush1.bf16.msra.mxu0 %v241
    %264 = vmatprep.subr.bf16.mxu0 0
    %265 = vmatpush1.bf16.msra.mxu0 %v242
    %266 = vmatprep.subr.bf16.mxu0 0
    %267 = vmatpush1.bf16.msra.mxu0 %v243
    %268 = vmatprep.subr.bf16.mxu0 0
    %269 = vmatpush1.bf16.msra.mxu0 0
    %270 = vmatprep.subr.bf16.mxu0 0
    %271 = vmatpush1.bf16.msra.mxu0 0
    %272 = vmatprep.subr.bf16.mxu0 0
    %273 = vmatpush1.bf16.msra.mxu0 0
    %274 = vmatprep.subr.bf16.mxu0 0
    %275 = vmatpush1.bf16.msra.mxu0 0
    %276 = vmatprep.subr.bf16.mxu0 0
    %277 = vmatpush1.bf16.msra.mxu0 0
    %278 = vmatprep.subr.bf16.mxu0 0
    %279 = vmatpush1.bf16.msra.mxu0 0
    %280 = vmatprep.subr.bf16.mxu0 0
    %281 = vmatpush1.bf16.msra.mxu0 0
    %282 = vmatprep.subr.bf16.mxu0 0
    %283 = vmatpush1.bf16.msra.mxu0 0
    %284 = vmatprep.mubr.bf16.mxu0 0
    %285 = vmatmul.mubr.bf16.gmra.mrb[0].mxu0 %v180
    %v286 = vpop.f32.mrb[0].mxu0
    %v287 = vadd.f32 %v202, %v286
    %v288 = vpop.f32.mrb[0].mxu0
    %v289 = vpop.f32.mrb[0].mxu0
    %v290 = vadd.f32 %v202, %v289
    %v291 = vpop.f32.mrb[0].mxu0
    %292 = vdwg.mxu0
    %293 = vmax.xlane.f32.xlu0 %v287
    %v294 = vpop.xlane.xlu0 %293
    %295 = vmax.xlane.f32.xlu0 %v290
    %v296 = vpop.xlane.xlu0 %295
    %v297 = vsub.f32 %v287, %v294
    %v298 = vsub.f32 %v290, %v296
    %v299 = vmul.f32 %v297, 1.442695
    %v300 = vpow.pop %v299
    %v301 = vmul.f32 %v298, 1.442695
    %v302 = vpow.pop %v301
    %303 = vadd.xlane.f32.xlu0 %v300
    %v304 = vpop.xlane.xlu0 %303
    %305 = vadd.xlane.f32.xlu0 %v302
    %v306 = vpop.xlane.xlu0 %305
    %v307 = vrcp.pop %v304
    %v308 = vrcp.pop %v306
    %v309 = vmul.f32 %v300, %v307
    %v310 = vmul.f32 %v302, %v308
    %311 = vst [vmem:[#allocation8] sm:$0xff] %v309
    %312 = vst [vmem:[#allocation8 + $0x8] sm:$0xff] %v310
    // Predicated region
    $region34: #{tpu_custom_call.1} parent=1 // pred_check
      _
    $region35: #{tpu_custom_call.1} parent=1 // pred_check_branch
      %314 = sbr.rel (0) target = $region37
    $region36: #{tpu_custom_call.1} parent=1 // pred_region
      %s316 = ssub.s32 256, 128
      %317 = vsyncadd [#allocation4], %s316
      %s318 = sshll.u32 [#allocation8], 4
      %s319 = int_to_ptr.vmem [resolvable:$true] %s318
      %324 = dma.vmem_to_hbm [thread:$0]  %s319, 128, %s5, [#allocation4], 128, 128, 8
    $region37: #{tpu_custom_call.1} parent=1 // pred_fallthru
      _
    // Predicated region
    $region38: #{tpu_custom_call.1} parent=1 // pred_check
      _
    $region39: #{tpu_custom_call.1} parent=1 // pred_check_branch
      %326 = sbr.rel (0) target = $region41
    $region40: #{tpu_custom_call.1} parent=1 // pred_region
      %327 = dma.done [#allocation4], 256
    $region41: #{tpu_custom_call.1} parent=1 // pred_fallthru
      _
    %328 = vsyncpa [#allocation3], 1
    %329 = vsyncpa [#allocation6], 1
    %330 = vsyncpa [#allocation4], 1

</llo_original>
